<compile_context>
chip_gen: v5e
topology: v5e:2x2
jax: 0.10.0
libtpu: 0.0.40
codegen_flags: <defaults>
</compile_context>

<pallas_src>
import functools

import jax
import jax.numpy as jnp
from jax.experimental import pallas as pl
from jax.experimental.pallas import tpu as pltpu

LANE = 128      # vreg lane width   (last-dim alignment target)
SUBLANE = 8     # vreg sublane width (second-to-last-dim alignment target)


def _round_up(x, m):
    return ((x + m - 1) // m) * m


# ----------------------------- Pallas kernel ------------------------------- #

def _fused_gcn_kernel(a_ref, x_ref, w0_ref, b0_ref, w_ref, b_ref,
                      p_ref, wl_ref, bl_ref, o_ref, *, num_layers):
    """Whole forward pass, fused.  Matmul operands bf16, accumulation f32.

    a_ref  : [Np, Np]        normalized adjacency (padded, bf16)
    x_ref  : [Np, Fp]        node features (padded, bf16)
    w0_ref : [Fp, Hp]        layer-0 conv weight (bf16)
    b0_ref : [1, Hp]         layer-0 conv bias (f32)
    w_ref  : [L-1, Hp, Hp]   stacked conv weights, layers 1..L-1 (bf16)
    b_ref  : [L-1, 1, Hp]    stacked conv biases (f32)
    p_ref  : [Gp, Np]        mean-pool operator (bf16)
    wl_ref : [Hp, Cp]        linear-head weight (bf16)
    bl_ref : [1, Cp]         linear-head bias (f32)
    o_ref  : [Gp, Cp]        output logits (f32)
    """
    # ---- layer 0 (separate operand so K is the real feature width) ----
    xw = jnp.dot(x_ref[...], w0_ref[...], preferred_element_type=jnp.float32)
    # a_ref is indexed per-use (not hoisted) so its vregs are not live across
    # the whole unrolled loop.
    h = jnp.dot(a_ref[...], xw.astype(jnp.bfloat16),
                preferred_element_type=jnp.float32) + b0_ref[...]
    if num_layers > 1:
        h = jnp.maximum(h, 0.0)          # ReLU (dropout = identity in eval)

    # ---- layers 1 .. L-1 (static unroll) ----
    for i in range(num_layers - 1):
        xw = jnp.dot(h.astype(jnp.bfloat16), w_ref[i],
                     preferred_element_type=jnp.float32)
        h = jnp.dot(a_ref[...], xw.astype(jnp.bfloat16),
                    preferred_element_type=jnp.float32) + b_ref[i]
        if i < num_layers - 2:
            h = jnp.maximum(h, 0.0)

    # ---- global mean pool (P @ H) + linear head, fused epilogue ----
    pooled = jnp.dot(p_ref[...], h.astype(jnp.bfloat16),
                     preferred_element_type=jnp.float32)
    o_ref[...] = (jnp.dot(pooled.astype(jnp.bfloat16), wl_ref[...],
                          preferred_element_type=jnp.float32)
                  + bl_ref[...])


# ------------------------------- JAX glue ---------------------------------- #

def build_norm_adj(edge_index, num_nodes, n_pad, dtype=jnp.bfloat16):
    """Dense GCN-normalized adjacency D^{-1/2}(A + I)D^{-1/2}, zero-padded.

    Built in f32 and cast to `dtype` at the end.  Uses .set(1.0) so duplicate
    edges still yield a binary adjacency (matches PyG GCNConv).
    A[target, source] = 1 aggregates source -> target.
    """
    src, dst = edge_index[0], edge_index[1]
    a = jnp.zeros((n_pad, n_pad), jnp.float32)
    a = a.at[dst, src].set(1.0)
    loop = jnp.arange(num_nodes)
    a = a.at[loop, loop].set(1.0)                      # self-loops on real nodes
    deg = a.sum(axis=1)
    dinv = jnp.where(deg > 0, 1.0 / jnp.sqrt(deg), 0.0)
    return (a * dinv[:, None] * dinv[None, :]).astype(dtype)


def build_pool_matrix(batch, num_graphs, num_nodes, g_pad, n_pad,
                      dtype=jnp.bfloat16):
    """P[g, n] = 1/|graph g| for real node n in graph g, else 0 (padded)."""
    batch_p = jnp.concatenate(
        [batch.astype(jnp.int32),
         jnp.full((n_pad - num_nodes,), -1, jnp.int32)])
    onehot = (batch_p[None, :] ==
              jnp.arange(g_pad, dtype=jnp.int32)[:, None]).astype(jnp.float32)
    counts = jnp.maximum(onehot.sum(axis=1, keepdims=True), 1.0)
    return (onehot / counts).astype(dtype)


def precompute_graph_operators(edge_index, batch, num_nodes, num_graphs):
    """O(N^2) densification, hoisted out of the per-forward hot path.

    Call once per graph/batch; the results can be reused across forwards.
    """
    n_pad = _round_up(num_nodes, LANE)
    g_pad = _round_up(num_graphs, SUBLANE)
    a_p = build_norm_adj(edge_index, num_nodes, n_pad)
    p_p = build_pool_matrix(batch, num_graphs, num_nodes, g_pad, n_pad)
    return a_p, p_p


def init_params(key, num_node_features, hidden_channels, num_classes, num_layers=3):
    dims = [num_node_features] + [hidden_channels] * num_layers
    params = {"conv_w": [], "conv_b": []}
    for i in range(num_layers):
        key, kw = jax.random.split(key)
        w = (jax.random.normal(kw, (dims[i], dims[i + 1]), jnp.float32)
             / jnp.sqrt(dims[i]))
        params["conv_w"].append(w)
        params["conv_b"].append(jnp.zeros((dims[i + 1],), jnp.float32))
    key, kw, kb = jax.random.split(key, 3)
    params["lin_w"] = (jax.random.normal(kw, (hidden_channels, num_classes),
                                         jnp.float32) / jnp.sqrt(hidden_channels))
    params["lin_b"] = jax.random.normal(kb, (num_classes,), jnp.float32) * 0.01
    return params


def _pad_params(params):
    """Pad/cast params to lane-dense bf16 (weights) / f32 (biases)."""
    num_layers = len(params["conv_w"])
    assert num_layers >= 2
    f = params["conv_w"][0].shape[0]
    hidden = params["conv_w"][0].shape[1]
    num_classes = params["lin_w"].shape[1]

    f_pad = _round_up(f, LANE)
    h_pad = _round_up(hidden, LANE)
    c_pad = _round_up(num_classes, LANE)

    w0 = params["conv_w"][0].astype(jnp.bfloat16)
    b0 = params["conv_b"][0].astype(jnp.float32)
    w0_p = jnp.zeros((f_pad, h_pad), jnp.bfloat16).at[:f, :hidden].set(w0)
    b0_p = jnp.zeros((1, h_pad), jnp.float32).at[0, :hidden].set(b0)

    w_stack = jnp.zeros((num_layers - 1, h_pad, h_pad), jnp.bfloat16)
    b_stack = jnp.zeros((num_layers - 1, 1, h_pad), jnp.float32)
    for i in range(1, num_layers):
        w = params["conv_w"][i].astype(jnp.bfloat16)
        b = params["conv_b"][i].astype(jnp.float32)
        w_stack = w_stack.at[i - 1, :w.shape[0], :w.shape[1]].set(w)
        b_stack = b_stack.at[i - 1, 0, :b.shape[0]].set(b)

    wl = params["lin_w"].astype(jnp.bfloat16)
    bl = params["lin_b"].astype(jnp.float32)
    wl_p = jnp.zeros((h_pad, c_pad), jnp.bfloat16).at[:wl.shape[0], :wl.shape[1]].set(wl)
    bl_p = jnp.zeros((1, c_pad), jnp.float32).at[0, :bl.shape[0]].set(bl)

    return dict(w0=w0_p, b0=b0_p, w=w_stack, b=b_stack, wl=wl_p, bl=bl_p,
                f_pad=f_pad, h_pad=h_pad, c_pad=c_pad, num_layers=num_layers)


def _vmem_limit_bytes(operands, out_bytes):
    """Right-size the VMEM request from the actual working set.

    Floor at 16 MiB (comfortably within every generation's default scoped
    limit), cap at 48 MiB so v7x (64 MiB physical per TC) keeps headroom.
    """
    in_bytes = sum(int(o.size) * o.dtype.itemsize for o in operands)
    working = in_bytes + out_bytes
    return int(min(48 << 20, max(16 << 20, 4 * working)))


def advanced_gcn_forward(params, x, edge_index, batch, num_graphs):
    n, f = x.shape
    num_classes = params["lin_w"].shape[1]

    pp = _pad_params(params)
    n_pad = _round_up(n, LANE)
    g_pad = _round_up(num_graphs, SUBLANE)

    # Padded bf16 node features [Np, Fp]  (bf16 in the wrapper => smaller DMA).
    x_p = jnp.zeros((n_pad, pp["f_pad"]), jnp.bfloat16).at[:n, :f].set(
        x.astype(jnp.bfloat16))

    # O(N^2) graph-operator construction, kept out of the kernel hot path.
    a_p, p_p = precompute_graph_operators(edge_index, batch, n, num_graphs)

    operands = (a_p, x_p, pp["w0"], pp["b0"], pp["w"], pp["b"],
                p_p, pp["wl"], pp["bl"])
    out_bytes = g_pad * pp["c_pad"] * 4

    vmem = pl.BlockSpec(memory_space=pltpu.MemorySpace.VMEM)
    kernel = functools.partial(_fused_gcn_kernel, num_layers=pp["num_layers"])
    out_p = pl.pallas_call(
        kernel,
        out_shape=jax.ShapeDtypeStruct((g_pad, pp["c_pad"]), jnp.float32),
        in_specs=[vmem] * len(operands),
        out_specs=vmem,
        compiler_params=pltpu.CompilerParams(
            vmem_limit_bytes=_vmem_limit_bytes(operands, out_bytes)),
    )(*operands)

    return out_p[:num_graphs, :num_classes]


# Pure-JAX f32 reference (unpadded) for correctness checking.
def _reference_forward(params, x, edge_index, batch, num_graphs):
    n = x.shape[0]
    a = build_norm_adj(edge_index, n, n, dtype=jnp.float32)
    h = x.astype(jnp.float32)
    num_layers = len(params["conv_w"])
    for i in range(num_layers):
        h = a @ (h @ params["conv_w"][i]) + params["conv_b"][i]
        if i < num_layers - 1:
            h = jnp.maximum(h, 0.0)
    onehot = (batch[None, :] == jnp.arange(num_graphs)[:, None]).astype(jnp.float32)
    pooled = (onehot @ h) / jnp.maximum(onehot.sum(axis=1, keepdims=True), 1.0)
    return pooled @ params["lin_w"] + params["lin_b"]


# --------------------------------- main ------------------------------------ #

if __name__ == "__main__":
    key = jax.random.PRNGKey(0)

    num_nodes = 32
    num_node_features = 7        # MUTAG-like
    hidden_channels = 64         # Config.hidden_channels
    num_classes = 2
    num_layers = 3               # Config.num_layers
    num_graphs = 2
    nodes_per_graph = num_nodes // num_graphs

    # Node features.
    key, kx = jax.random.split(key)
    x = jax.random.normal(kx, (num_nodes, num_node_features), jnp.float32)

    # Two ring graphs of 16 nodes each, undirected (both edge directions).
    src_list, dst_list = [], []
    for g in range(num_graphs):
        base = g * nodes_per_graph
        for i in range(nodes_per_graph):
            a = base + i
            b = base + (i + 1) % nodes_per_graph
            src_list += [a, b]
            dst_list += [b, a]
    edge_index = jnp.array([src_list, dst_list], dtype=jnp.int32)

    batch = jnp.repeat(jnp.arange(num_graphs, dtype=jnp.int32), nodes_per_graph)

    params = init_params(jax.random.PRNGKey(0), num_node_features,
                         hidden_channels, num_classes, num_layers)

    out = advanced_gcn_forward(params, x, edge_index, batch, num_graphs)
    out = jax.block_until_ready(out)

    ref = jax.block_until_ready(
        _reference_forward(params, x, edge_index, batch, num_graphs))

    assert out.shape == (num_graphs, num_classes)
    assert jnp.all(jnp.isfinite(out))
    # bf16 matmul datapath (f32 accumulation) => relaxed tolerance vs f32 ref.
    assert jnp.allclose(out, ref, rtol=3e-2, atol=3e-2), (
        out, ref, jnp.max(jnp.abs(out - ref)))
    print("KERNEL_OK")
</pallas_src>

<mosaic_0001>
module attributes {stable_mosaic.version = 11 : i64} {
  func.func @_fused_gcn_kernel(%arg0: memref<128x128xbf16, #tpu.memory_space<vmem>>, %arg1: memref<128x128xbf16, #tpu.memory_space<vmem>>, %arg2: memref<128x128xbf16, #tpu.memory_space<vmem>>, %arg3: memref<1x128xf32, #tpu.memory_space<vmem>>, %arg4: memref<2x128x128xbf16, #tpu.memory_space<vmem>>, %arg5: memref<2x1x128xf32, #tpu.memory_space<vmem>>, %arg6: memref<8x128xbf16, #tpu.memory_space<vmem>>, %arg7: memref<128x128xbf16, #tpu.memory_space<vmem>>, %arg8: memref<1x128xf32, #tpu.memory_space<vmem>>, %arg9: memref<8x128xf32, #tpu.memory_space<vmem>>) attributes {dimension_semantics = [], scalar_prefetch = 0 : i64, scratch_operands = 0 : i64, tpu.core_type = #tpu.core_type<tc>} {
    %c0 = arith.constant 0 : index
    %c0_0 = arith.constant 0 : index
    %0 = vector.load %arg1[%c0, %c0_0] : memref<128x128xbf16, #tpu.memory_space<vmem>>, vector<128x128xbf16>
    %c0_1 = arith.constant 0 : index
    %c0_2 = arith.constant 0 : index
    %1 = vector.load %arg2[%c0_1, %c0_2] : memref<128x128xbf16, #tpu.memory_space<vmem>>, vector<128x128xbf16>
    %cst = arith.constant dense<0.000000e+00> : vector<128x128xf32>
    %2 = tpu.matmul %0, %1, %cst {dimension_numbers = #tpu.dot_dimension_numbers<[1], [0], [0], [1], [0, 0, 1, 1], [], []>} : vector<128x128xbf16>, vector<128x128xbf16>, vector<128x128xf32> -> vector<128x128xf32>
    %c0_3 = arith.constant 0 : index
    %c0_4 = arith.constant 0 : index
    %3 = vector.load %arg0[%c0_3, %c0_4] : memref<128x128xbf16, #tpu.memory_space<vmem>>, vector<128x128xbf16>
    %4 = arith.truncf %2 : vector<128x128xf32> to vector<128x128xbf16>
    %cst_5 = arith.constant dense<0.000000e+00> : vector<128x128xf32>
    %5 = tpu.matmul %3, %4, %cst_5 {dimension_numbers = #tpu.dot_dimension_numbers<[1], [0], [0], [1], [0, 0, 1, 1], [], []>} : vector<128x128xbf16>, vector<128x128xbf16>, vector<128x128xf32> -> vector<128x128xf32>
    %c0_6 = arith.constant 0 : index
    %c0_7 = arith.constant 0 : index
    %6 = vector.load %arg3[%c0_6, %c0_7] : memref<1x128xf32, #tpu.memory_space<vmem>>, vector<1x128xf32>
    %7 = vector.broadcast %6 : vector<1x128xf32> to vector<128x128xf32>
    %8 = arith.addf %5, %7 : vector<128x128xf32>
    %cst_8 = arith.constant 0.000000e+00 : f32
    %9 = vector.broadcast %cst_8 : f32 to vector<128x128xf32>
    %10 = arith.maximumf %8, %9 : vector<128x128xf32>
    %11 = arith.truncf %10 : vector<128x128xf32> to vector<128x128xbf16>
    %c0_9 = arith.constant 0 : index
    %c0_10 = arith.constant 0 : index
    %c0_11 = arith.constant 0 : index
    %12 = vector.load %arg4[%c0_9, %c0_10, %c0_11] : memref<2x128x128xbf16, #tpu.memory_space<vmem>>, vector<1x128x128xbf16>
    %13 = vector.shape_cast %12 : vector<1x128x128xbf16> to vector<128x128xbf16>
    %cst_12 = arith.constant dense<0.000000e+00> : vector<128x128xf32>
    %14 = tpu.matmul %11, %13, %cst_12 {dimension_numbers = #tpu.dot_dimension_numbers<[1], [0], [0], [1], [0, 0, 1, 1], [], []>} : vector<128x128xbf16>, vector<128x128xbf16>, vector<128x128xf32> -> vector<128x128xf32>
    %c0_13 = arith.constant 0 : index
    %c0_14 = arith.constant 0 : index
    %15 = vector.load %arg0[%c0_13, %c0_14] : memref<128x128xbf16, #tpu.memory_space<vmem>>, vector<128x128xbf16>
    %16 = arith.truncf %14 : vector<128x128xf32> to vector<128x128xbf16>
    %cst_15 = arith.constant dense<0.000000e+00> : vector<128x128xf32>
    %17 = tpu.matmul %15, %16, %cst_15 {dimension_numbers = #tpu.dot_dimension_numbers<[1], [0], [0], [1], [0, 0, 1, 1], [], []>} : vector<128x128xbf16>, vector<128x128xbf16>, vector<128x128xf32> -> vector<128x128xf32>
    %c0_16 = arith.constant 0 : index
    %c0_17 = arith.constant 0 : index
    %c0_18 = arith.constant 0 : index
    %18 = vector.load %arg5[%c0_16, %c0_17, %c0_18] : memref<2x1x128xf32, #tpu.memory_space<vmem>>, vector<1x1x128xf32>
    %19 = vector.shape_cast %18 : vector<1x1x128xf32> to vector<1x128xf32>
    %20 = vector.broadcast %19 : vector<1x128xf32> to vector<128x128xf32>
    %21 = arith.addf %17, %20 : vector<128x128xf32>
    %cst_19 = arith.constant 0.000000e+00 : f32
    %22 = vector.broadcast %cst_19 : f32 to vector<128x128xf32>
    %23 = arith.maximumf %21, %22 : vector<128x128xf32>
    %24 = arith.truncf %23 : vector<128x128xf32> to vector<128x128xbf16>
    %c1 = arith.constant 1 : index
    %c0_20 = arith.constant 0 : index
    %c0_21 = arith.constant 0 : index
    %25 = vector.load %arg4[%c1, %c0_20, %c0_21] : memref<2x128x128xbf16, #tpu.memory_space<vmem>>, vector<1x128x128xbf16>
    %26 = vector.shape_cast %25 : vector<1x128x128xbf16> to vector<128x128xbf16>
    %cst_22 = arith.constant dense<0.000000e+00> : vector<128x128xf32>
    %27 = tpu.matmul %24, %26, %cst_22 {dimension_numbers = #tpu.dot_dimension_numbers<[1], [0], [0], [1], [0, 0, 1, 1], [], []>} : vector<128x128xbf16>, vector<128x128xbf16>, vector<128x128xf32> -> vector<128x128xf32>
    %c0_23 = arith.constant 0 : index
    %c0_24 = arith.constant 0 : index
    %28 = vector.load %arg0[%c0_23, %c0_24] : memref<128x128xbf16, #tpu.memory_space<vmem>>, vector<128x128xbf16>
    %29 = arith.truncf %27 : vector<128x128xf32> to vector<128x128xbf16>
    %cst_25 = arith.constant dense<0.000000e+00> : vector<128x128xf32>
    %30 = tpu.matmul %28, %29, %cst_25 {dimension_numbers = #tpu.dot_dimension_numbers<[1], [0], [0], [1], [0, 0, 1, 1], [], []>} : vector<128x128xbf16>, vector<128x128xbf16>, vector<128x128xf32> -> vector<128x128xf32>
    %c1_26 = arith.constant 1 : index
    %c0_27 = arith.constant 0 : index
    %c0_28 = arith.constant 0 : index
    %31 = vector.load %arg5[%c1_26, %c0_27, %c0_28] : memref<2x1x128xf32, #tpu.memory_space<vmem>>, vector<1x1x128xf32>
    %32 = vector.shape_cast %31 : vector<1x1x128xf32> to vector<1x128xf32>
    %33 = vector.broadcast %32 : vector<1x128xf32> to vector<128x128xf32>
    %34 = arith.addf %30, %33 : vector<128x128xf32>
    %c0_29 = arith.constant 0 : index
    %c0_30 = arith.constant 0 : index
    %35 = vector.load %arg6[%c0_29, %c0_30] : memref<8x128xbf16, #tpu.memory_space<vmem>>, vector<8x128xbf16>
    %36 = arith.truncf %34 : vector<128x128xf32> to vector<128x128xbf16>
    %cst_31 = arith.constant dense<0.000000e+00> : vector<8x128xf32>
    %37 = tpu.matmul %35, %36, %cst_31 {dimension_numbers = #tpu.dot_dimension_numbers<[1], [0], [0], [1], [0, 0, 1, 1], [], []>} : vector<8x128xbf16>, vector<128x128xbf16>, vector<8x128xf32> -> vector<8x128xf32>
    %38 = arith.truncf %37 : vector<8x128xf32> to vector<8x128xbf16>
    %c0_32 = arith.constant 0 : index
    %c0_33 = arith.constant 0 : index
    %39 = vector.load %arg7[%c0_32, %c0_33] : memref<128x128xbf16, #tpu.memory_space<vmem>>, vector<128x128xbf16>
    %cst_34 = arith.constant dense<0.000000e+00> : vector<8x128xf32>
    %40 = tpu.matmul %38, %39, %cst_34 {dimension_numbers = #tpu.dot_dimension_numbers<[1], [0], [0], [1], [0, 0, 1, 1], [], []>} : vector<8x128xbf16>, vector<128x128xbf16>, vector<8x128xf32> -> vector<8x128xf32>
    %c0_35 = arith.constant 0 : index
    %c0_36 = arith.constant 0 : index
    %41 = vector.load %arg8[%c0_35, %c0_36] : memref<1x128xf32, #tpu.memory_space<vmem>>, vector<1x128xf32>
    %42 = vector.broadcast %41 : vector<1x128xf32> to vector<8x128xf32>
    %43 = arith.addf %40, %42 : vector<8x128xf32>
    %c0_37 = arith.constant 0 : index
    %c0_38 = arith.constant 0 : index
    %44 = vector.load %arg9[%c0_37, %c0_38] : memref<8x128xf32, #tpu.memory_space<vmem>>, vector<8x128xf32>
    tpu.vector_store %arg9[%c0_37, %c0_38], %43 {strides = array<i32>} : memref<8x128xf32, #tpu.memory_space<vmem>>, vector<8x128xf32>,
    return
  }
}

</mosaic_0001>

<llo_original>
// kernel: tpu_custom_call.1
$region0: #{tpu_custom_call.1}
  #allocation0 [shape = 'u32[]', space=smem, size = 0x4, offset = 0x4, fixed_abs, tag = 'smem constant byte address 0x4 - core index']
  #allocation1 [shape = 'u32[72,128]{1,0:T(1,128)}', space=vmem, size = 0x9000, scoped, tag = 'internal scratch']
  %s0 = inlined_call_operand.hbm [shape: bf16[128,128], index: 0, kind: input, shape index: {}]
  %s1 = inlined_call_operand.hbm [shape: bf16[128,128], index: 1, kind: input, shape index: {}]
  %s2 = inlined_call_operand.hbm [shape: bf16[128,128], index: 2, kind: input, shape index: {}]
  %s3 = inlined_call_operand.vmem [shape: f32[1,128], index: 3, kind: input, shape index: {}]
  %s4 = inlined_call_operand.hbm [shape: bf16[2,128,128], index: 4, kind: input, shape index: {}]
  %s5 = inlined_call_operand.hbm [shape: f32[2,1,128], index: 5, kind: input, shape index: {}]
  %s6 = inlined_call_operand.vmem [shape: bf16[8,128], index: 6, kind: input, shape index: {}]
  %s7 = inlined_call_operand.hbm [shape: bf16[128,128], index: 7, kind: input, shape index: {}]
  %s8 = inlined_call_operand.vmem [shape: f32[1,128], index: 8, kind: input, shape index: {}]
  %s9 = inlined_call_operand.hbm [shape: f32[8,128], index: 9, kind: output, shape index: {}]
  %s10 = sld [smem:[#allocation0]]
  $region70: #{tpu_custom_call.1} parent=0
    _
  %s12 = ssub.s32 1, %s10
  %s13 = scalar_select 0, %s12, %s10
  $region1: #{tpu_custom_call.1} parent=0
    #allocation2 [shape = 'u8[32768]{0}', space=vmem, size = 0x8000, scoped, tag = 'input window, operand 0, single buffered']
    #allocation3 [shape = 's32[1]{0}', space=sflag, size = 0x4, scoped, tag = 'scoped memory for tpu_custom_call.1']
    #allocation4 [shape = 's32[1]{0}', space=sflag, size = 0x4, scoped, tag = 'scoped memory for tpu_custom_call.1']
    #allocation5 [shape = 'u8[32768]{0}', space=vmem, size = 0x8000, scoped, tag = 'input window, operand 1, single buffered']
    #allocation6 [shape = 's32[1]{0}', space=sflag, size = 0x4, scoped, tag = 'scoped memory for tpu_custom_call.1']
    #allocation7 [shape = 'u8[32768]{0}', space=vmem, size = 0x8000, scoped, tag = 'input window, operand 2, single buffered']
    #allocation8 [shape = 'u8[65536]{0}', space=vmem, size = 0x10000, scoped, tag = 'input window, operand 4, single buffered']
    #allocation9 [shape = 's32[1]{0}', space=sflag, size = 0x4, scoped, tag = 'scoped memory for tpu_custom_call.1']
    #allocation10 [shape = 'u8[1024]{0}', space=vmem, size = 0x400, scoped, tag = 'input window, operand 5, single buffered']
    #allocation11 [shape = 'u8[32768]{0}', space=vmem, size = 0x8000, scoped, tag = 'input window, operand 7, single buffered']
    #allocation12 [shape = 's32[1]{0}', space=sflag, size = 0x4, scoped, tag = 'scoped memory for tpu_custom_call.1']
    #allocation13 [shape = 'u8[4096]{0}', space=vmem, size = 0x1000, scoped, tag = 'output window, operand 0, single buffered']
    %14 = vsyncpa [#allocation3], 0
    %15 = vsyncpa [#allocation6], 0
    %16 = vsyncpa [#allocation9], 0
    %17 = vsyncpa [#allocation12], 0
    %18 = vsyncpa [#allocation4], 0
    // Predicated region
    $region2: #{tpu_custom_call.1} parent=1 // pred_check
      _
    $region3: #{tpu_custom_call.1} parent=1 // pred_check_branch
      %20 = sbr.rel (0) target = $region5
    $region4: #{tpu_custom_call.1} parent=1 // pred_region
      %22 = vsyncadd [#allocation3], 0
      %s23 = sshll.u32 %s0, 4
      %s24 = int_to_ptr.hbm [resolvable:$true] %s23
      %s25 = sshll.u32 [#allocation2], 4
      %s26 = int_to_ptr.vmem [resolvable:$true] %s25
      %31 = dma.hbm_to_vmem [thread:$0]  %s24, 1024, %s26, [#allocation3], 64, 64, 4
    $region5: #{tpu_custom_call.1} parent=1 // pred_fallthru
      _
    // Predicated region
    $region6: #{tpu_custom_call.1} parent=1 // pred_check
      _
    $region7: #{tpu_custom_call.1} parent=1 // pred_check_branch
      %33 = sbr.rel (0) target = $region9
    $region8: #{tpu_custom_call.1} parent=1 // pred_region
      %35 = vsyncadd [#allocation6], 0
      %s36 = sshll.u32 %s1, 4
      %s37 = int_to_ptr.hbm [resolvable:$true] %s36
      %s38 = sshll.u32 [#allocation5], 4
      %s39 = int_to_ptr.vmem [resolvable:$true] %s38
      %44 = dma.hbm_to_vmem [thread:$0]  %s37, 1024, %s39, [#allocation6], 64, 64, 4
    $region9: #{tpu_custom_call.1} parent=1 // pred_fallthru
      _
    // Predicated region
    $region10: #{tpu_custom_call.1} parent=1 // pred_check
      _
    $region11: #{tpu_custom_call.1} parent=1 // pred_check_branch
      %46 = sbr.rel (0) target = $region13
    $region12: #{tpu_custom_call.1} parent=1 // pred_region
      %48 = vsyncadd [#allocation6], 0
      %s49 = sshll.u32 %s2, 4
      %s50 = int_to_ptr.hbm [resolvable:$true] %s49
      %s51 = sshll.u32 [#allocation7], 4
      %s52 = int_to_ptr.vmem [resolvable:$true] %s51
      %57 = dma.hbm_to_vmem [thread:$0]  %s50, 1024, %s52, [#allocation6], 64, 64, 4
    $region13: #{tpu_custom_call.1} parent=1 // pred_fallthru
      _
    // Predicated region
    $region14: #{tpu_custom_call.1} parent=1 // pred_check
      _
    $region15: #{tpu_custom_call.1} parent=1 // pred_check_branch
      %59 = sbr.rel (0) target = $region17
    $region16: #{tpu_custom_call.1} parent=1 // pred_region
      _
    $region17: #{tpu_custom_call.1} parent=1 // pred_fallthru
      _
    // Predicated region
    $region18: #{tpu_custom_call.1} parent=1 // pred_check
      _
    $region19: #{tpu_custom_call.1} parent=1 // pred_check_branch
      %61 = sbr.rel (0) target = $region21
    $region20: #{tpu_custom_call.1} parent=1 // pred_region
      %63 = vsyncadd [#allocation9], 0
      %s64 = sshll.u32 %s4, 4
      %s65 = int_to_ptr.hbm [resolvable:$true] %s64
      %s66 = sshll.u32 [#allocation8], 4
      %s67 = int_to_ptr.vmem [resolvable:$true] %s66
      %72 = dma.hbm_to_vmem [thread:$0]  %s65, 2048, %s67, [#allocation9], 64, 64, 4
    $region21: #{tpu_custom_call.1} parent=1 // pred_fallthru
      _
    // Predicated region
    $region22: #{tpu_custom_call.1} parent=1 // pred_check
      _
    $region23: #{tpu_custom_call.1} parent=1 // pred_check_branch
      %74 = sbr.rel (0) target = $region25
    $region24: #{tpu_custom_call.1} parent=1 // pred_region
      %76 = vsyncadd [#allocation9], 0
      %s77 = sshll.u32 %s5, 4
      %s78 = int_to_ptr.hbm [resolvable:$true] %s77
      %s79 = sshll.u32 [#allocation10], 4
      %s80 = int_to_ptr.vmem [resolvable:$true] %s79
      %85 = dma.hbm_to_vmem [thread:$0]  %s78, 32, %s80, [#allocation9], 16, 16, 1
    $region25: #{tpu_custom_call.1} parent=1 // pred_fallthru
      _
    // Predicated region
    $region26: #{tpu_custom_call.1} parent=1 // pred_check
      _
    $region27: #{tpu_custom_call.1} parent=1 // pred_check_branch
      %87 = sbr.rel (0) target = $region29
    $region28: #{tpu_custom_call.1} parent=1 // pred_region
      _
    $region29: #{tpu_custom_call.1} parent=1 // pred_fallthru
      _
    // Predicated region
    $region30: #{tpu_custom_call.1} parent=1 // pred_check
      _
    $region31: #{tpu_custom_call.1} parent=1 // pred_check_branch
      %89 = sbr.rel (0) target = $region33
    $region32: #{tpu_custom_call.1} parent=1 // pred_region
      %91 = vsyncadd [#allocation12], 0
      %s92 = sshll.u32 %s7, 4
      %s93 = int_to_ptr.hbm [resolvable:$true] %s92
      %s94 = sshll.u32 [#allocation11], 4
      %s95 = int_to_ptr.vmem [resolvable:$true] %s94
      %100 = dma.hbm_to_vmem [thread:$0]  %s93, 1024, %s95, [#allocation12], 64, 64, 4
    $region33: #{tpu_custom_call.1} parent=1 // pred_fallthru
      _
    // Predicated region
    $region34: #{tpu_custom_call.1} parent=1 // pred_check
      _
    $region35: #{tpu_custom_call.1} parent=1 // pred_check_branch
      %102 = sbr.rel (0) target = $region37
    $region36: #{tpu_custom_call.1} parent=1 // pred_region
      _
    $region37: #{tpu_custom_call.1} parent=1 // pred_fallthru
      _
    // Predicated region
    $region38: #{tpu_custom_call.1} parent=1 // pred_check
      _
    $region39: #{tpu_custom_call.1} parent=1 // pred_check_branch
      %104 = sbr.rel (0) target = $region41
    $region40: #{tpu_custom_call.1} parent=1 // pred_region
      %106 = dma.done [#allocation3], 1024
    $region41: #{tpu_custom_call.1} parent=1 // pred_fallthru
      _
    // Predicated region
    $region42: #{tpu_custom_call.1} parent=1 // pred_check
      _
    $region43: #{tpu_custom_call.1} parent=1 // pred_check_branch
      %108 = sbr.rel (0) target = $region45
    $region44: #{tpu_custom_call.1} parent=1 // pred_region
      %110 = dma.done [#allocation6], 1024
    $region45: #{tpu_custom_call.1} parent=1 // pred_fallthru
      _
    // Predicated region
    $region46: #{tpu_custom_call.1} parent=1 // pred_check
      _
    $region47: #{tpu_custom_call.1} parent=1 // pred_check_branch
      %112 = sbr.rel (0) target = $region49
    $region48: #{tpu_custom_call.1} parent=1 // pred_region
      %114 = dma.done [#allocation6], 1024
    $region49: #{tpu_custom_call.1} parent=1 // pred_fallthru
      _
    // Predicated region
    $region50: #{tpu_custom_call.1} parent=1 // pred_check
      _
    $region51: #{tpu_custom_call.1} parent=1 // pred_check_branch
      %116 = sbr.rel (0) target = $region53
    $region52: #{tpu_custom_call.1} parent=1 // pred_region
      %118 = dma.done [#allocation9], 2048
    $region53: #{tpu_custom_call.1} parent=1 // pred_fallthru
      _
    // Predicated region
    $region54: #{tpu_custom_call.1} parent=1 // pred_check
      _
    $region55: #{tpu_custom_call.1} parent=1 // pred_check_branch
      %120 = sbr.rel (0) target = $region57
    $region56: #{tpu_custom_call.1} parent=1 // pred_region
      %122 = dma.done [#allocation9], 32
    $region57: #{tpu_custom_call.1} parent=1 // pred_fallthru
      _
    // Predicated region
    $region58: #{tpu_custom_call.1} parent=1 // pred_check
      _
    $region59: #{tpu_custom_call.1} parent=1 // pred_check_branch
      %124 = sbr.rel (0) target = $region61
    $region60: #{tpu_custom_call.1} parent=1 // pred_region
      %126 = dma.done [#allocation12], 1024
    $region61: #{tpu_custom_call.1} parent=1 // pred_fallthru
      _
    %v127 = vld [vmem:[#allocation5] sm:$0xf]
    %v128 = vld [vmem:[#allocation5 + $0x4] sm:$0xf]
    %v129 = vld [vmem:[#allocation5 + $0x8] sm:$0xf]
    %v130 = vld [vmem:[#allocation5 + $0xc] sm:$0xf]
    %v131 = vld [vmem:[#allocation5 + $0x10] sm:$0xf]
    %v132 = vld [vmem:[#allocation5 + $0x14] sm:$0xf]
    %v133 = vld [vmem:[#allocation5 + $0x18] sm:$0xf]
    %v134 = vld [vmem:[#allocation5 + $0x1c] sm:$0xf]
    %v135 = vld [vmem:[#allocation5 + $0x20] sm:$0xf]
    %v136 = vld [vmem:[#allocation5 + $0x24] sm:$0xf]
    %v137 = vld [vmem:[#allocation5 + $0x28] sm:$0xf]
    %v138 = vld [vmem:[#allocation5 + $0x2c] sm:$0xf]
    %v139 = vld [vmem:[#allocation5 + $0x30] sm:$0xf]
    %v140 = vld [vmem:[#allocation5 + $0x34] sm:$0xf]
    %v141 = vld [vmem:[#allocation5 + $0x38] sm:$0xf]
    %v142 = vld [vmem:[#allocation5 + $0x3c] sm:$0xf]
    %v143 = vld [vmem:[#allocation7] sm:$0xf]
    %v144 = vld [vmem:[#allocation7 + $0x4] sm:$0xf]
    %v145 = vld [vmem:[#allocation7 + $0x8] sm:$0xf]
    %v146 = vld [vmem:[#allocation7 + $0xc] sm:$0xf]
    %v147 = vld [vmem:[#allocation7 + $0x10] sm:$0xf]
    %v148 = vld [vmem:[#allocation7 + $0x14] sm:$0xf]
    %v149 = vld [vmem:[#allocation7 + $0x18] sm:$0xf]
    %v150 = vld [vmem:[#allocation7 + $0x1c] sm:$0xf]
    %v151 = vld [vmem:[#allocation7 + $0x20] sm:$0xf]
    %v152 = vld [vmem:[#allocation7 + $0x24] sm:$0xf]
    %v153 = vld [vmem:[#allocation7 + $0x28] sm:$0xf]
    %v154 = vld [vmem:[#allocation7 + $0x2c] sm:$0xf]
    %v155 = vld [vmem:[#allocation7 + $0x30] sm:$0xf]
    %v156 = vld [vmem:[#allocation7 + $0x34] sm:$0xf]
    %v157 = vld [vmem:[#allocation7 + $0x38] sm:$0xf]
    %v158 = vld [vmem:[#allocation7 + $0x3c] sm:$0xf]
    %v175 = vunpack.c.l.b16 %v127
    %v176 = vunpack.c.l.b16 %v128
    %v177 = vunpack.c.l.b16 %v129
    %v178 = vunpack.c.l.b16 %v130
    %v179 = vunpack.c.l.b16 %v131
    %v180 = vunpack.c.l.b16 %v132
    %v181 = vunpack.c.l.b16 %v133
    %v182 = vunpack.c.l.b16 %v134
    %v183 = vunpack.c.l.b16 %v135
    %v184 = vunpack.c.l.b16 %v136
    %v185 = vunpack.c.l.b16 %v137
    %v186 = vunpack.c.l.b16 %v138
    %v187 = vunpack.c.l.b16 %v139
    %v188 = vunpack.c.l.b16 %v140
    %v189 = vunpack.c.l.b16 %v141
    %v190 = vunpack.c.l.b16 %v142
    %v191 = vpack.c.b16 %v176, %v175
    %v192 = vpack.c.b16 %v178, %v177
    %v193 = vpack.c.b16 %v180, %v179
    %v194 = vpack.c.b16 %v182, %v181
    %v195 = vpack.c.b16 %v184, %v183
    %v196 = vpack.c.b16 %v186, %v185
    %v197 = vpack.c.b16 %v188, %v187
    %v198 = vpack.c.b16 %v190, %v189
    %v223 = vunpack.c.l.b16 %v143
    %v224 = vunpack.c.l.b16 %v144
    %v225 = vunpack.c.l.b16 %v145
    %v226 = vunpack.c.l.b16 %v146
    %v227 = vunpack.c.l.b16 %v147
    %v228 = vunpack.c.l.b16 %v148
    %v229 = vunpack.c.l.b16 %v149
    %v230 = vunpack.c.l.b16 %v150
    %v231 = vunpack.c.l.b16 %v151
    %v232 = vunpack.c.l.b16 %v152
    %v233 = vunpack.c.l.b16 %v153
    %v234 = vunpack.c.l.b16 %v154
    %v235 = vunpack.c.l.b16 %v155
    %v236 = vunpack.c.l.b16 %v156
    %v237 = vunpack.c.l.b16 %v157
    %v238 = vunpack.c.l.b16 %v158
    %v239 = vpack.c.b16 %v224, %v223
    %v240 = vpack.c.b16 %v226, %v225
    %v241 = vpack.c.b16 %v228, %v227
    %v242 = vpack.c.b16 %v230, %v229
    %v243 = vpack.c.b16 %v232, %v231
    %v244 = vpack.c.b16 %v234, %v233
    %v245 = vpack.c.b16 %v236, %v235
    %v246 = vpack.c.b16 %v238, %v237
    %255 = vmatpush.bf16.msra.mxu0 %v246
    %256 = vmatpush.bf16.msra.mxu0 %v245
    %257 = vmatpush.bf16.msra.mxu0 %v244
    %258 = vmatpush.bf16.msra.mxu0 %v243
    %259 = vmatpush.bf16.msra.mxu0 %v242
    %260 = vmatpush.bf16.msra.mxu0 %v241
    %261 = vmatpush.bf16.msra.mxu0 %v240
    %262 = vmatpush.bf16.msra.mxu0 %v239
    %263 = vmatmul.bf16.gmra.mxu0 %v191
    %v264 = vpop.f32.mrf.mxu0
    %v265 = vadd.f32 0.0, %v264
    %v266 = vpop.f32.mrf.mxu0
    %v267 = vadd.f32 0.0, %v266
    %268 = vmatmul.bf16.gmra.mxu0 %v192
    %v269 = vpop.f32.mrf.mxu0
    %v270 = vadd.f32 0.0, %v269
    %v271 = vpop.f32.mrf.mxu0
    %v272 = vadd.f32 0.0, %v271
    %273 = vmatmul.bf16.gmra.mxu0 %v193
    %v274 = vpop.f32.mrf.mxu0
    %v275 = vadd.f32 0.0, %v274
    %v276 = vpop.f32.mrf.mxu0
    %v277 = vadd.f32 0.0, %v276
    %278 = vmatmul.bf16.gmra.mxu0 %v194
    %v279 = vpop.f32.mrf.mxu0
    %v280 = vadd.f32 0.0, %v279
    %v281 = vpop.f32.mrf.mxu0
    %v282 = vadd.f32 0.0, %v281
    %283 = vmatmul.bf16.gmra.mxu0 %v195
    %v284 = vpop.f32.mrf.mxu0
    %v285 = vadd.f32 0.0, %v284
    %v286 = vpop.f32.mrf.mxu0
    %v287 = vadd.f32 0.0, %v286
    %288 = vmatmul.bf16.gmra.mxu0 %v196
    %v289 = vpop.f32.mrf.mxu0
    %v290 = vadd.f32 0.0, %v289
    %v291 = vpop.f32.mrf.mxu0
    %v292 = vadd.f32 0.0, %v291
    %293 = vmatmul.bf16.gmra.mxu0 %v197
    %v294 = vpop.f32.mrf.mxu0
    %v295 = vadd.f32 0.0, %v294
    %v296 = vpop.f32.mrf.mxu0
    %v297 = vadd.f32 0.0, %v296
    %298 = vmatmul.bf16.gmra.mxu0 %v198
    %v299 = vpop.f32.mrf.mxu0
    %v300 = vadd.f32 0.0, %v299
    %v301 = vpop.f32.mrf.mxu0
    %v302 = vadd.f32 0.0, %v301
    %303 = vdwg.mxu0
    %v304 = vld [vmem:[#allocation2] sm:$0xf]
    %v305 = vld [vmem:[#allocation2 + $0x4] sm:$0xf]
    %v306 = vld [vmem:[#allocation2 + $0x8] sm:$0xf]
    %v307 = vld [vmem:[#allocation2 + $0xc] sm:$0xf]
    %v308 = vld [vmem:[#allocation2 + $0x10] sm:$0xf]
    %v309 = vld [vmem:[#allocation2 + $0x14] sm:$0xf]
    %v310 = vld [vmem:[#allocation2 + $0x18] sm:$0xf]
    %v311 = vld [vmem:[#allocation2 + $0x1c] sm:$0xf]
    %v312 = vld [vmem:[#allocation2 + $0x20] sm:$0xf]
    %v313 = vld [vmem:[#allocation2 + $0x24] sm:$0xf]
    %v314 = vld [vmem:[#allocation2 + $0x28] sm:$0xf]
    %v315 = vld [vmem:[#allocation2 + $0x2c] sm:$0xf]
    %v316 = vld [vmem:[#allocation2 + $0x30] sm:$0xf]
    %v317 = vld [vmem:[#allocation2 + $0x34] sm:$0xf]
    %v318 = vld [vmem:[#allocation2 + $0x38] sm:$0xf]
    %v319 = vld [vmem:[#allocation2 + $0x3c] sm:$0xf]
    %v320 = vpack.c.bf16 %v267, %v265
    %v321 = vpack.c.bf16 %v272, %v270
    %v322 = vpack.c.bf16 %v277, %v275
    %v323 = vpack.c.bf16 %v282, %v280
    %v324 = vpack.c.bf16 %v287, %v285
    %v325 = vpack.c.bf16 %v292, %v290
    %v326 = vpack.c.bf16 %v297, %v295
    %v327 = vpack.c.bf16 %v302, %v300
    %v328 = vld [vmem:[%s3] sm:$0x1]
    %v330 = vperm.slane %v328, 0
    %v348 = vunpack.c.l.b16 %v304
    %v349 = vunpack.c.l.b16 %v305
    %v350 = vunpack.c.l.b16 %v306
    %v351 = vunpack.c.l.b16 %v307
    %v352 = vunpack.c.l.b16 %v308
    %v353 = vunpack.c.l.b16 %v309
    %v354 = vunpack.c.l.b16 %v310
    %v355 = vunpack.c.l.b16 %v311
    %v356 = vunpack.c.l.b16 %v312
    %v357 = vunpack.c.l.b16 %v313
    %v358 = vunpack.c.l.b16 %v314
    %v359 = vunpack.c.l.b16 %v315
    %v360 = vunpack.c.l.b16 %v316
    %v361 = vunpack.c.l.b16 %v317
    %v362 = vunpack.c.l.b16 %v318
    %v363 = vunpack.c.l.b16 %v319
    %v364 = vpack.c.b16 %v349, %v348
    %v365 = vpack.c.b16 %v351, %v350
    %v366 = vpack.c.b16 %v353, %v352
    %v367 = vpack.c.b16 %v355, %v354
    %v368 = vpack.c.b16 %v357, %v356
    %v369 = vpack.c.b16 %v359, %v358
    %v370 = vpack.c.b16 %v361, %v360
    %v371 = vpack.c.b16 %v363, %v362
    %380 = vmatpush.bf16.msra.mxu0 %v327
    %381 = vmatpush.bf16.msra.mxu0 %v326
    %382 = vmatpush.bf16.msra.mxu0 %v325
    %383 = vmatpush.bf16.msra.mxu0 %v324
    %384 = vmatpush.bf16.msra.mxu0 %v323
    %385 = vmatpush.bf16.msra.mxu0 %v322
    %386 = vmatpush.bf16.msra.mxu0 %v321
    %387 = vmatpush.bf16.msra.mxu0 %v320
    %388 = vmatmul.bf16.gmra.mxu0 %v364
    %v389 = vpop.f32.mrf.mxu0
    %v390 = vadd.f32 %v330, %v389
    %v391 = vpop.f32.mrf.mxu0
    %v392 = vadd.f32 %v330, %v391
    %393 = vmatmul.bf16.gmra.mxu0 %v365
    %v394 = vpop.f32.mrf.mxu0
    %v395 = vadd.f32 %v330, %v394
    %v396 = vpop.f32.mrf.mxu0
    %v397 = vadd.f32 %v330, %v396
    %398 = vmatmul.bf16.gmra.mxu0 %v366
    %v399 = vpop.f32.mrf.mxu0
    %v400 = vadd.f32 %v330, %v399
    %v401 = vpop.f32.mrf.mxu0
    %v402 = vadd.f32 %v330, %v401
    %403 = vmatmul.bf16.gmra.mxu0 %v367
    %v404 = vpop.f32.mrf.mxu0
    %v405 = vadd.f32 %v330, %v404
    %v406 = vpop.f32.mrf.mxu0
    %v407 = vadd.f32 %v330, %v406
    %408 = vmatmul.bf16.gmra.mxu0 %v368
    %v409 = vpop.f32.mrf.mxu0
    %v410 = vadd.f32 %v330, %v409
    %v411 = vpop.f32.mrf.mxu0
    %v412 = vadd.f32 %v330, %v411
    %413 = vmatmul.bf16.gmra.mxu0 %v369
    %v414 = vpop.f32.mrf.mxu0
    %v415 = vadd.f32 %v330, %v414
    %v416 = vpop.f32.mrf.mxu0
    %v417 = vadd.f32 %v330, %v416
    %418 = vmatmul.bf16.gmra.mxu0 %v370
    %v419 = vpop.f32.mrf.mxu0
    %v420 = vadd.f32 %v330, %v419
    %v421 = vpop.f32.mrf.mxu0
    %v422 = vadd.f32 %v330, %v421
    %423 = vmatmul.bf16.gmra.mxu0 %v371
    %v424 = vpop.f32.mrf.mxu0
    %v425 = vadd.f32 %v330, %v424
    %v426 = vpop.f32.mrf.mxu0
    %v427 = vadd.f32 %v330, %v426
    %428 = vdwg.mxu0
    %v429 = vmax.f32 %v390, 0.0
    %v430 = vmax.f32 %v392, 0.0
    %v431 = vmax.f32 %v395, 0.0
    %v432 = vmax.f32 %v397, 0.0
    %v433 = vmax.f32 %v400, 0.0
    %v434 = vmax.f32 %v402, 0.0
    %v435 = vmax.f32 %v405, 0.0
    %v436 = vmax.f32 %v407, 0.0
    %v437 = vmax.f32 %v410, 0.0
    %v438 = vmax.f32 %v412, 0.0
    %v439 = vmax.f32 %v415, 0.0
    %v440 = vmax.f32 %v417, 0.0
    %v441 = vmax.f32 %v420, 0.0
    %v442 = vmax.f32 %v422, 0.0
    %v443 = vmax.f32 %v425, 0.0
    %v444 = vmax.f32 %v427, 0.0
    %v445 = vpack.c.bf16 %v430, %v429
    %v446 = vpack.c.bf16 %v432, %v431
    %v447 = vpack.c.bf16 %v434, %v433
    %v448 = vpack.c.bf16 %v436, %v435
    %v449 = vpack.c.bf16 %v438, %v437
    %v450 = vpack.c.bf16 %v440, %v439
    %v451 = vpack.c.bf16 %v442, %v441
    %v452 = vpack.c.bf16 %v444, %v443
    %v453 = vld [vmem:[#allocation8] sm:$0xf]
    %v454 = vld [vmem:[#allocation8 + $0x4] sm:$0xf]
    %v455 = vld [vmem:[#allocation8 + $0x8] sm:$0xf]
    %v456 = vld [vmem:[#allocation8 + $0xc] sm:$0xf]
    %v457 = vld [vmem:[#allocation8 + $0x10] sm:$0xf]
    %v458 = vld [vmem:[#allocation8 + $0x14] sm:$0xf]
    %v459 = vld [vmem:[#allocation8 + $0x18] sm:$0xf]
    %v460 = vld [vmem:[#allocation8 + $0x1c] sm:$0xf]
    %v461 = vld [vmem:[#allocation8 + $0x20] sm:$0xf]
    %v462 = vld [vmem:[#allocation8 + $0x24] sm:$0xf]
    %v463 = vld [vmem:[#allocation8 + $0x28] sm:$0xf]
    %v464 = vld [vmem:[#allocation8 + $0x2c] sm:$0xf]
    %v465 = vld [vmem:[#allocation8 + $0x30] sm:$0xf]
    %v466 = vld [vmem:[#allocation8 + $0x34] sm:$0xf]
    %v467 = vld [vmem:[#allocation8 + $0x38] sm:$0xf]
    %v468 = vld [vmem:[#allocation8 + $0x3c] sm:$0xf]
    %v485 = vunpack.c.l.b16 %v453
    %v486 = vunpack.c.l.b16 %v454
    %v487 = vunpack.c.l.b16 %v455
    %v488 = vunpack.c.l.b16 %v456
    %v489 = vunpack.c.l.b16 %v457
    %v490 = vunpack.c.l.b16 %v458
    %v491 = vunpack.c.l.b16 %v459
    %v492 = vunpack.c.l.b16 %v460
    %v493 = vunpack.c.l.b16 %v461
    %v494 = vunpack.c.l.b16 %v462
    %v495 = vunpack.c.l.b16 %v463
    %v496 = vunpack.c.l.b16 %v464
    %v497 = vunpack.c.l.b16 %v465
    %v498 = vunpack.c.l.b16 %v466
    %v499 = vunpack.c.l.b16 %v467
    %v500 = vunpack.c.l.b16 %v468
    %v501 = vpack.c.b16 %v486, %v485
    %v502 = vpack.c.b16 %v488, %v487
    %v503 = vpack.c.b16 %v490, %v489
    %v504 = vpack.c.b16 %v492, %v491
    %v505 = vpack.c.b16 %v494, %v493
    %v506 = vpack.c.b16 %v496, %v495
    %v507 = vpack.c.b16 %v498, %v497
    %v508 = vpack.c.b16 %v500, %v499
    %517 = vmatpush.bf16.msra.mxu0 %v508
    %518 = vmatpush.bf16.msra.mxu0 %v507
    %519 = vmatpush.bf16.msra.mxu0 %v506
    %520 = vmatpush.bf16.msra.mxu0 %v505
    %521 = vmatpush.bf16.msra.mxu0 %v504
    %522 = vmatpush.bf16.msra.mxu0 %v503
    %523 = vmatpush.bf16.msra.mxu0 %v502
    %524 = vmatpush.bf16.msra.mxu0 %v501
    %525 = vmatmul.bf16.gmra.mxu0 %v445
    %v526 = vpop.f32.mrf.mxu0
    %v527 = vadd.f32 0.0, %v526
    %v528 = vpop.f32.mrf.mxu0
    %v529 = vadd.f32 0.0, %v528
    %530 = vmatmul.bf16.gmra.mxu0 %v446
    %v531 = vpop.f32.mrf.mxu0
    %v532 = vadd.f32 0.0, %v531
    %v533 = vpop.f32.mrf.mxu0
    %v534 = vadd.f32 0.0, %v533
    %535 = vmatmul.bf16.gmra.mxu0 %v447
    %v536 = vpop.f32.mrf.mxu0
    %v537 = vadd.f32 0.0, %v536
    %v538 = vpop.f32.mrf.mxu0
    %v539 = vadd.f32 0.0, %v538
    %540 = vmatmul.bf16.gmra.mxu0 %v448
    %v541 = vpop.f32.mrf.mxu0
    %v542 = vadd.f32 0.0, %v541
    %v543 = vpop.f32.mrf.mxu0
    %v544 = vadd.f32 0.0, %v543
    %545 = vmatmul.bf16.gmra.mxu0 %v449
    %v546 = vpop.f32.mrf.mxu0
    %v547 = vadd.f32 0.0, %v546
    %v548 = vpop.f32.mrf.mxu0
    %v549 = vadd.f32 0.0, %v548
    %550 = vmatmul.bf16.gmra.mxu0 %v450
    %v551 = vpop.f32.mrf.mxu0
    %v552 = vadd.f32 0.0, %v551
    %v553 = vpop.f32.mrf.mxu0
    %v554 = vadd.f32 0.0, %v553
    %555 = vmatmul.bf16.gmra.mxu0 %v451
    %v556 = vpop.f32.mrf.mxu0
    %v557 = vadd.f32 0.0, %v556
    %v558 = vpop.f32.mrf.mxu0
    %v559 = vadd.f32 0.0, %v558
    %560 = vmatmul.bf16.gmra.mxu0 %v452
    %v561 = vpop.f32.mrf.mxu0
    %v562 = vadd.f32 0.0, %v561
    %v563 = vpop.f32.mrf.mxu0
    %v564 = vadd.f32 0.0, %v563
    %565 = vdwg.mxu0
    %v566 = vpack.c.bf16 %v529, %v527
    %v567 = vpack.c.bf16 %v534, %v532
    %v568 = vpack.c.bf16 %v539, %v537
    %v569 = vpack.c.bf16 %v544, %v542
    %v570 = vpack.c.bf16 %v549, %v547
    %v571 = vpack.c.bf16 %v554, %v552
    %v572 = vpack.c.bf16 %v559, %v557
    %v573 = vpack.c.bf16 %v564, %v562
    %v574 = vld [vmem:[#allocation10] sm:$0x1]
    %v576 = vperm.slane %v574, 0
    %578 = vmatpush.bf16.msra.mxu0 %v573
    %579 = vmatpush.bf16.msra.mxu0 %v572
    %580 = vmatpush.bf16.msra.mxu0 %v571
    %581 = vmatpush.bf16.msra.mxu0 %v570
    %582 = vmatpush.bf16.msra.mxu0 %v569
    %583 = vmatpush.bf16.msra.mxu0 %v568
    %584 = vmatpush.bf16.msra.mxu0 %v567
    %585 = vmatpush.bf16.msra.mxu0 %v566
    %586 = vmatmul.bf16.gmra.mxu0 %v364
    %v587 = vpop.f32.mrf.mxu0
    %v588 = vadd.f32 %v576, %v587
    %v589 = vpop.f32.mrf.mxu0
    %v590 = vadd.f32 %v576, %v589
    %591 = vmatmul.bf16.gmra.mxu0 %v365
    %v592 = vpop.f32.mrf.mxu0
    %v593 = vadd.f32 %v576, %v592
    %v594 = vpop.f32.mrf.mxu0
    %v595 = vadd.f32 %v576, %v594
    %596 = vmatmul.bf16.gmra.mxu0 %v366
    %v597 = vpop.f32.mrf.mxu0
    %v598 = vadd.f32 %v576, %v597
    %v599 = vpop.f32.mrf.mxu0
    %v600 = vadd.f32 %v576, %v599
    %601 = vmatmul.bf16.gmra.mxu0 %v367
    %v602 = vpop.f32.mrf.mxu0
    %v603 = vadd.f32 %v576, %v602
    %v604 = vpop.f32.mrf.mxu0
    %v605 = vadd.f32 %v576, %v604
    %606 = vmatmul.bf16.gmra.mxu0 %v368
    %v607 = vpop.f32.mrf.mxu0
    %v608 = vadd.f32 %v576, %v607
    %v609 = vpop.f32.mrf.mxu0
    %v610 = vadd.f32 %v576, %v609
    %611 = vmatmul.bf16.gmra.mxu0 %v369
    %v612 = vpop.f32.mrf.mxu0
    %v613 = vadd.f32 %v576, %v612
    %v614 = vpop.f32.mrf.mxu0
    %v615 = vadd.f32 %v576, %v614
    %616 = vmatmul.bf16.gmra.mxu0 %v370
    %v617 = vpop.f32.mrf.mxu0
    %v618 = vadd.f32 %v576, %v617
    %v619 = vpop.f32.mrf.mxu0
    %v620 = vadd.f32 %v576, %v619
    %621 = vmatmul.bf16.gmra.mxu0 %v371
    %v622 = vpop.f32.mrf.mxu0
    %v623 = vadd.f32 %v576, %v622
    %v624 = vpop.f32.mrf.mxu0
    %v625 = vadd.f32 %v576, %v624
    %626 = vdwg.mxu0
    %v627 = vmax.f32 %v588, 0.0
    %v628 = vmax.f32 %v590, 0.0
    %v629 = vmax.f32 %v593, 0.0
    %v630 = vmax.f32 %v595, 0.0
    %v631 = vmax.f32 %v598, 0.0
    %v632 = vmax.f32 %v600, 0.0
    %v633 = vmax.f32 %v603, 0.0
    %v634 = vmax.f32 %v605, 0.0
    %v635 = vmax.f32 %v608, 0.0
    %v636 = vmax.f32 %v610, 0.0
    %v637 = vmax.f32 %v613, 0.0
    %v638 = vmax.f32 %v615, 0.0
    %v639 = vmax.f32 %v618, 0.0
    %v640 = vmax.f32 %v620, 0.0
    %v641 = vmax.f32 %v623, 0.0
    %v642 = vmax.f32 %v625, 0.0
    %v643 = vpack.c.bf16 %v628, %v627
    %v644 = vpack.c.bf16 %v630, %v629
    %v645 = vpack.c.bf16 %v632, %v631
    %v646 = vpack.c.bf16 %v634, %v633
    %v647 = vpack.c.bf16 %v636, %v635
    %v648 = vpack.c.bf16 %v638, %v637
    %v649 = vpack.c.bf16 %v640, %v639
    %v650 = vpack.c.bf16 %v642, %v641
    %s651 = scalar_lea.vmem [#allocation8], 64
    %v652 = vld [vmem:[%s651] sm:$0xf]
    %v653 = vld [vmem:[%s651 + $0x4] sm:$0xf]
    %v654 = vld [vmem:[%s651 + $0x8] sm:$0xf]
    %v655 = vld [vmem:[%s651 + $0xc] sm:$0xf]
    %v656 = vld [vmem:[%s651 + $0x10] sm:$0xf]
    %v657 = vld [vmem:[%s651 + $0x14] sm:$0xf]
    %v658 = vld [vmem:[%s651 + $0x18] sm:$0xf]
    %v659 = vld [vmem:[%s651 + $0x1c] sm:$0xf]
    %v660 = vld [vmem:[%s651 + $0x20] sm:$0xf]
    %v661 = vld [vmem:[%s651 + $0x24] sm:$0xf]
    %v662 = vld [vmem:[%s651 + $0x28] sm:$0xf]
    %v663 = vld [vmem:[%s651 + $0x2c] sm:$0xf]
    %v664 = vld [vmem:[%s651 + $0x30] sm:$0xf]
    %v665 = vld [vmem:[%s651 + $0x34] sm:$0xf]
    %v666 = vld [vmem:[%s651 + $0x38] sm:$0xf]
    %v667 = vld [vmem:[%s651 + $0x3c] sm:$0xf]
    %v684 = vunpack.c.l.b16 %v652
    %v685 = vunpack.c.l.b16 %v653
    %v686 = vunpack.c.l.b16 %v654
    %v687 = vunpack.c.l.b16 %v655
    %v688 = vunpack.c.l.b16 %v656
    %v689 = vunpack.c.l.b16 %v657
    %v690 = vunpack.c.l.b16 %v658
    %v691 = vunpack.c.l.b16 %v659
    %v692 = vunpack.c.l.b16 %v660
    %v693 = vunpack.c.l.b16 %v661
    %v694 = vunpack.c.l.b16 %v662
    %v695 = vunpack.c.l.b16 %v663
    %v696 = vunpack.c.l.b16 %v664
    %v697 = vunpack.c.l.b16 %v665
    %v698 = vunpack.c.l.b16 %v666
    %v699 = vunpack.c.l.b16 %v667
    %v700 = vpack.c.b16 %v685, %v684
    %v701 = vpack.c.b16 %v687, %v686
    %v702 = vpack.c.b16 %v689, %v688
    %v703 = vpack.c.b16 %v691, %v690
    %v704 = vpack.c.b16 %v693, %v692
    %v705 = vpack.c.b16 %v695, %v694
    %v706 = vpack.c.b16 %v697, %v696
    %v707 = vpack.c.b16 %v699, %v698
    %716 = vmatpush.bf16.msra.mxu0 %v707
    %717 = vmatpush.bf16.msra.mxu0 %v706
    %718 = vmatpush.bf16.msra.mxu0 %v705
    %719 = vmatpush.bf16.msra.mxu0 %v704
    %720 = vmatpush.bf16.msra.mxu0 %v703
    %721 = vmatpush.bf16.msra.mxu0 %v702
    %722 = vmatpush.bf16.msra.mxu0 %v701
    %723 = vmatpush.bf16.msra.mxu0 %v700
    %724 = vmatmul.bf16.gmra.mxu0 %v643
    %v725 = vpop.f32.mrf.mxu0
    %v726 = vadd.f32 0.0, %v725
    %v727 = vpop.f32.mrf.mxu0
    %v728 = vadd.f32 0.0, %v727
    %729 = vmatmul.bf16.gmra.mxu0 %v644
    %v730 = vpop.f32.mrf.mxu0
    %v731 = vadd.f32 0.0, %v730
    %v732 = vpop.f32.mrf.mxu0
    %v733 = vadd.f32 0.0, %v732
    %734 = vmatmul.bf16.gmra.mxu0 %v645
    %v735 = vpop.f32.mrf.mxu0
    %v736 = vadd.f32 0.0, %v735
    %v737 = vpop.f32.mrf.mxu0
    %v738 = vadd.f32 0.0, %v737
    %739 = vmatmul.bf16.gmra.mxu0 %v646
    %v740 = vpop.f32.mrf.mxu0
    %v741 = vadd.f32 0.0, %v740
    %v742 = vpop.f32.mrf.mxu0
    %v743 = vadd.f32 0.0, %v742
    %744 = vmatmul.bf16.gmra.mxu0 %v647
    %v745 = vpop.f32.mrf.mxu0
    %v746 = vadd.f32 0.0, %v745
    %v747 = vpop.f32.mrf.mxu0
    %v748 = vadd.f32 0.0, %v747
    %749 = vmatmul.bf16.gmra.mxu0 %v648
    %v750 = vpop.f32.mrf.mxu0
    %v751 = vadd.f32 0.0, %v750
    %v752 = vpop.f32.mrf.mxu0
    %v753 = vadd.f32 0.0, %v752
    %754 = vmatmul.bf16.gmra.mxu0 %v649
    %v755 = vpop.f32.mrf.mxu0
    %v756 = vadd.f32 0.0, %v755
    %v757 = vpop.f32.mrf.mxu0
    %v758 = vadd.f32 0.0, %v757
    %759 = vmatmul.bf16.gmra.mxu0 %v650
    %v760 = vpop.f32.mrf.mxu0
    %v761 = vadd.f32 0.0, %v760
    %v762 = vpop.f32.mrf.mxu0
    %v763 = vadd.f32 0.0, %v762
    %764 = vdwg.mxu0
    %v765 = vpack.c.bf16 %v728, %v726
    %v766 = vpack.c.bf16 %v733, %v731
    %v767 = vpack.c.bf16 %v738, %v736
    %v768 = vpack.c.bf16 %v743, %v741
    %v769 = vpack.c.bf16 %v748, %v746
    %v770 = vpack.c.bf16 %v753, %v751
    %v771 = vpack.c.bf16 %v758, %v756
    %v772 = vpack.c.bf16 %v763, %v761
    %s773 = scalar_lea.vmem [#allocation10], 1
    %v774 = vld [vmem:[%s773] sm:$0x1]
    %v776 = vperm.slane %v774, 0
    %778 = vmatpush.bf16.msra.mxu0 %v772
    %779 = vmatpush.bf16.msra.mxu0 %v771
    %780 = vmatpush.bf16.msra.mxu0 %v770
    %781 = vmatpush.bf16.msra.mxu0 %v769
    %782 = vmatpush.bf16.msra.mxu0 %v768
    %783 = vmatpush.bf16.msra.mxu0 %v767
    %784 = vmatpush.bf16.msra.mxu0 %v766
    %785 = vmatpush.bf16.msra.mxu0 %v765
    %786 = vmatmul.bf16.gmra.mxu0 %v364
    %v787 = vpop.f32.mrf.mxu0
    %v788 = vadd.f32 %v776, %v787
    %v789 = vpop.f32.mrf.mxu0
    %v790 = vadd.f32 %v776, %v789
    %791 = vmatmul.bf16.gmra.mxu0 %v365
    %v792 = vpop.f32.mrf.mxu0
    %v793 = vadd.f32 %v776, %v792
    %v794 = vpop.f32.mrf.mxu0
    %v795 = vadd.f32 %v776, %v794
    %796 = vmatmul.bf16.gmra.mxu0 %v366
    %v797 = vpop.f32.mrf.mxu0
    %v798 = vadd.f32 %v776, %v797
    %v799 = vpop.f32.mrf.mxu0
    %v800 = vadd.f32 %v776, %v799
    %801 = vmatmul.bf16.gmra.mxu0 %v367
    %v802 = vpop.f32.mrf.mxu0
    %v803 = vadd.f32 %v776, %v802
    %v804 = vpop.f32.mrf.mxu0
    %v805 = vadd.f32 %v776, %v804
    %806 = vmatmul.bf16.gmra.mxu0 %v368
    %v807 = vpop.f32.mrf.mxu0
    %v808 = vadd.f32 %v776, %v807
    %v809 = vpop.f32.mrf.mxu0
    %v810 = vadd.f32 %v776, %v809
    %811 = vmatmul.bf16.gmra.mxu0 %v369
    %v812 = vpop.f32.mrf.mxu0
    %v813 = vadd.f32 %v776, %v812
    %v814 = vpop.f32.mrf.mxu0
    %v815 = vadd.f32 %v776, %v814
    %816 = vmatmul.bf16.gmra.mxu0 %v370
    %v817 = vpop.f32.mrf.mxu0
    %v818 = vadd.f32 %v776, %v817
    %v819 = vpop.f32.mrf.mxu0
    %v820 = vadd.f32 %v776, %v819
    %821 = vmatmul.bf16.gmra.mxu0 %v371
    %v822 = vpop.f32.mrf.mxu0
    %v823 = vadd.f32 %v776, %v822
    %v824 = vpop.f32.mrf.mxu0
    %v825 = vadd.f32 %v776, %v824
    %826 = vdwg.mxu0
    %v827 = vld [vmem:[%s6] sm:$0xf]
    %v828 = vpack.c.bf16 %v790, %v788
    %v829 = vpack.c.bf16 %v795, %v793
    %v830 = vpack.c.bf16 %v800, %v798
    %v831 = vpack.c.bf16 %v805, %v803
    %v832 = vpack.c.bf16 %v810, %v808
    %v833 = vpack.c.bf16 %v815, %v813
    %v834 = vpack.c.bf16 %v820, %v818
    %v835 = vpack.c.bf16 %v825, %v823
    %836 = vmatpush.bf16.msra.mxu0 %v835
    %837 = vmatpush.bf16.msra.mxu0 %v834
    %838 = vmatpush.bf16.msra.mxu0 %v833
    %839 = vmatpush.bf16.msra.mxu0 %v832
    %840 = vmatpush.bf16.msra.mxu0 %v831
    %841 = vmatpush.bf16.msra.mxu0 %v830
    %842 = vmatpush.bf16.msra.mxu0 %v829
    %843 = vmatpush.bf16.msra.mxu0 %v828
    %844 = vmatmul.bf16.gmra.mxu0 %v827
    %v845 = vpop.f32.mrf.mxu0
    %v846 = vadd.f32 0.0, %v845
    %v847 = vpop.f32.mrf.mxu0
    %848 = vdwg.mxu0
    %v849 = vpack.c.bf16 %v846, %v846
    %v850 = vld [vmem:[#allocation11] sm:$0xf]
    %v851 = vld [vmem:[#allocation11 + $0x4] sm:$0xf]
    %v852 = vld [vmem:[#allocation11 + $0x8] sm:$0xf]
    %v853 = vld [vmem:[#allocation11 + $0xc] sm:$0xf]
    %v854 = vld [vmem:[#allocation11 + $0x10] sm:$0xf]
    %v855 = vld [vmem:[#allocation11 + $0x14] sm:$0xf]
    %v856 = vld [vmem:[#allocation11 + $0x18] sm:$0xf]
    %v857 = vld [vmem:[#allocation11 + $0x1c] sm:$0xf]
    %v858 = vld [vmem:[#allocation11 + $0x20] sm:$0xf]
    %v859 = vld [vmem:[#allocation11 + $0x24] sm:$0xf]
    %v860 = vld [vmem:[#allocation11 + $0x28] sm:$0xf]
    %v861 = vld [vmem:[#allocation11 + $0x2c] sm:$0xf]
    %v862 = vld [vmem:[#allocation11 + $0x30] sm:$0xf]
    %v863 = vld [vmem:[#allocation11 + $0x34] sm:$0xf]
    %v864 = vld [vmem:[#allocation11 + $0x38] sm:$0xf]
    %v865 = vld [vmem:[#allocation11 + $0x3c] sm:$0xf]
    %v866 = vld [vmem:[%s8] sm:$0x1]
    %v868 = vperm.slane %v866, 0
    %v886 = vunpack.c.l.b16 %v850
    %v887 = vunpack.c.l.b16 %v851
    %v888 = vunpack.c.l.b16 %v852
    %v889 = vunpack.c.l.b16 %v853
    %v890 = vunpack.c.l.b16 %v854
    %v891 = vunpack.c.l.b16 %v855
    %v892 = vunpack.c.l.b16 %v856
    %v893 = vunpack.c.l.b16 %v857
    %v894 = vunpack.c.l.b16 %v858
    %v895 = vunpack.c.l.b16 %v859
    %v896 = vunpack.c.l.b16 %v860
    %v897 = vunpack.c.l.b16 %v861
    %v898 = vunpack.c.l.b16 %v862
    %v899 = vunpack.c.l.b16 %v863
    %v900 = vunpack.c.l.b16 %v864
    %v901 = vunpack.c.l.b16 %v865
    %v902 = vpack.c.b16 %v887, %v886
    %v903 = vpack.c.b16 %v889, %v888
    %v904 = vpack.c.b16 %v891, %v890
    %v905 = vpack.c.b16 %v893, %v892
    %v906 = vpack.c.b16 %v895, %v894
    %v907 = vpack.c.b16 %v897, %v896
    %v908 = vpack.c.b16 %v899, %v898
    %v909 = vpack.c.b16 %v901, %v900
    %918 = vmatpush.bf16.msra.mxu0 %v909
    %919 = vmatpush.bf16.msra.mxu0 %v908
    %920 = vmatpush.bf16.msra.mxu0 %v907
    %921 = vmatpush.bf16.msra.mxu0 %v906
    %922 = vmatpush.bf16.msra.mxu0 %v905
    %923 = vmatpush.bf16.msra.mxu0 %v904
    %924 = vmatpush.bf16.msra.mxu0 %v903
    %925 = vmatpush.bf16.msra.mxu0 %v902
    %926 = vmatmul.bf16.gmra.mxu0 %v849
    %v927 = vpop.f32.mrf.mxu0
    %v928 = vadd.f32 %v868, %v927
    %v929 = vpop.f32.mrf.mxu0
    %930 = vdwg.mxu0
    %931 = vst [vmem:[#allocation13] sm:$0xff] %v928
    // Predicated region
    $region62: #{tpu_custom_call.1} parent=1 // pred_check
      _
    $region63: #{tpu_custom_call.1} parent=1 // pred_check_branch
      %933 = sbr.rel (0) target = $region65
    $region64: #{tpu_custom_call.1} parent=1 // pred_region
      %935 = vsyncadd [#allocation4], 0
      %s937 = sshll.u32 [#allocation13], 4
      %s938 = int_to_ptr.vmem [resolvable:$true] %s937
      %s939 = sshll.u32 %s9, 4
      %s940 = int_to_ptr.hbm [resolvable:$true] %s939
      %942 = dma.vmem_to_hbm [thread:$0]  %s938, 128, %s940, [#allocation4]
    $region65: #{tpu_custom_call.1} parent=1 // pred_fallthru
      _
    // Predicated region
    $region66: #{tpu_custom_call.1} parent=1 // pred_check
      _
    $region67: #{tpu_custom_call.1} parent=1 // pred_check_branch
      %944 = sbr.rel (0) target = $region69
    $region68: #{tpu_custom_call.1} parent=1 // pred_region
      %946 = dma.done [#allocation4], 128
    $region69: #{tpu_custom_call.1} parent=1 // pred_fallthru
      _
    %947 = vsyncpa [#allocation3], 1
    %948 = vsyncpa [#allocation6], 1
    %949 = vsyncpa [#allocation9], 1
    %950 = vsyncpa [#allocation12], 1
    %951 = vsyncpa [#allocation4], 1

</llo_original>
